<compile_context>
chip_gen: v7x
topology: tpu7x:2x2x1
jax: 0.10.0
libtpu: 0.0.40
codegen_flags: <defaults>
</compile_context>

<pallas_src>
import jax
import jax.numpy as jnp
from jax import lax
from jax.experimental import pallas as pl
from jax.experimental.pallas import tpu as pltpu


def _round_up(x, m):
    return (x + m - 1) // m * m


# ----------------------------- Pallas kernel ------------------------------ #
def _conv_matmul_kernel(p_ref, w_ref, b_ref, o_ref):
    # p_ref: (TM, K) bf16 patches, w_ref: (K, Npad) bf16,
    # b_ref: (1, Npad) f32, o_ref: (TM, Npad) f32
    acc = jnp.dot(p_ref[...], w_ref[...], preferred_element_type=jnp.float32)
    o_ref[...] = (acc + b_ref[...]).astype(o_ref.dtype)


def _pick_tm(M, K, N_pad, in_bytes, out_bytes, vmem_budget=20 << 20):
    """Largest M-tile whose double-buffered in+out blocks fit the VMEM budget.

    Budget is kept well under v7x's 32 MiB default scoped VMEM so the same
    choice is safe on v5e/v6e/v7x.
    """
    tm = 128
    for cand in (256, 512, 1024, 2048, 4096):
        blk_bytes = 2 * cand * (K * in_bytes + N_pad * out_bytes)
        if blk_bytes <= vmem_budget and cand <= 2 * M:
            tm = cand
    # Keep >=2 parallel grid steps where possible (v7x has 2 TensorCores).
    while tm > 256 and pl.cdiv(M, tm) < 2:
        tm //= 2
    return tm


def _conv3d_matmul(patches, w_mat, bias):
    """patches: (M, K), w_mat: (K, Npad), bias: (1, Npad) f32 -> (M, Npad) f32."""
    M, K = patches.shape
    N_pad = w_mat.shape[1]
    in_bytes = patches.dtype.itemsize
    out_bytes = 4  # f32 output / accumulation

    tm = _pick_tm(M, K, N_pad, in_bytes, out_bytes)
    M_pad = pl.cdiv(M, tm) * tm
    if M_pad != M:
        patches = jnp.pad(patches, ((0, M_pad - M), (0, 0)))

    # double-buffered patch + output blocks, resident weight + bias blocks
    est_vmem = (2 * tm * K * in_bytes + 2 * K * N_pad * in_bytes
                + 2 * tm * N_pad * out_bytes + 2 * N_pad * out_bytes)
    cost = pl.CostEstimate(
        flops=2 * M_pad * K * N_pad,
        transcendentals=0,
        bytes_accessed=(M_pad * K * in_bytes + K * N_pad * in_bytes
                        + N_pad * out_bytes + M_pad * N_pad * out_bytes))

    out = pl.pallas_call(
        _conv_matmul_kernel,
        out_shape=jax.ShapeDtypeStruct((M_pad, N_pad), jnp.float32),
        grid_spec=pltpu.PrefetchScalarGridSpec(
            num_scalar_prefetch=0,
            grid=(M_pad // tm,),
            in_specs=[
                pl.BlockSpec((tm, K), lambda i: (i, 0)),
                pl.BlockSpec((K, N_pad), lambda i: (0, 0)),
                pl.BlockSpec((1, N_pad), lambda i: (0, 0)),
            ],
            out_specs=pl.BlockSpec((tm, N_pad), lambda i: (i, 0))),
        compiler_params=pltpu.CompilerParams(
            dimension_semantics=("parallel",),
            vmem_limit_bytes=int(min(48 << 20, max(32 << 20, 4 * est_vmem))),
            # Let XLA fuse the im2col gather into the patch operand instead of a
            # separate HBM materialization + round trip.
            allow_input_fusion=[True, False, False]),
        cost_estimate=cost,
    )(patches, w_mat, bias)
    return out[:M]


# ------------------------------ glue (JAX) -------------------------------- #
def _im2col_3d(x_ndhwc, k, s):
    """x: (n, D, H, W, C) NDHWC -> ((n*Do*Ho*Wo, k^3*C), (Do, Ho, Wo)).

    K is ordered (kd, kh, kw, c) with channels innermost (lane-contiguous), so
    no post-expansion transpose is needed.
    """
    n, D, H, W, C = x_ndhwc.shape
    Do = (D - k) // s + 1
    Ho = (H - k) // s + 1
    Wo = (W - k) // s + 1
    taps = []
    for kd in range(k):
        for kh in range(k):
            for kw in range(k):
                taps.append(
                    x_ndhwc[:,
                            kd:kd + s * (Do - 1) + 1:s,
                            kh:kh + s * (Ho - 1) + 1:s,
                            kw:kw + s * (Wo - 1) + 1:s, :])
    p = jnp.stack(taps, axis=4)                           # (n, Do, Ho, Wo, k^3, C)
    return p.reshape(n * Do * Ho * Wo, k * k * k * C), (Do, Ho, Wo)


class DownScale:
    """JAX/Pallas equivalent of the PyTorch DownScale module (forward pass)."""

    def __init__(self, in_channels, out_channels, stride, kernel_size, key,
                 compute_dtype=jnp.bfloat16):
        self.in_channels = in_channels
        self.out_channels = out_channels
        self.stride = stride
        self.kernel_size = kernel_size
        # bf16 matmul operands (f32 accumulation) ~halves HBM bytes of the
        # dominant patch stream and uses the fast MXU path on v5e/v6e/v7x.
        self.compute_dtype = compute_dtype
        kw_, kb_ = jax.random.split(key)
        fan_in = in_channels * kernel_size ** 3
        bound = 1.0 / (fan_in ** 0.5)
        # weight: OIDHW, PyTorch-style uniform init; Conv3d default bias=True.
        self.weight = jax.random.uniform(
            kw_, (out_channels, in_channels, kernel_size, kernel_size, kernel_size),
            dtype=jnp.float32, minval=-bound, maxval=bound)
        self.bias = jax.random.uniform(
            kb_, (out_channels,), dtype=jnp.float32, minval=-bound, maxval=bound)

    def __call__(self, x):
        # x: (n, c, D, H, W) NCDHW, f32
        n = x.shape[0]
        k, s = self.kernel_size, self.stride
        N = self.out_channels
        cdt = self.compute_dtype

        # Single NCDHW -> NDHWC transpose of the raw input (channels-innermost
        # makes the patch extraction lane-contiguous); cast once to bf16.
        x_ndhwc = jnp.transpose(x, (0, 2, 3, 4, 1)).astype(cdt)
        # TODO(synk): fully in-kernel window extraction for the general k != s
        # case needs manual DMA (overlapping windows are not expressible with
        # Blocked BlockSpecs); here the im2col is left to XLA and allowed to
        # fuse into the pallas_call input.
        patches, (Do, Ho, Wo) = _im2col_3d(x_ndhwc, k, s)        # (M, K)
        K = patches.shape[1]

        # Lane-dense output: pad out_channels to a multiple of 128.
        N_pad = _round_up(N, 128)
        w_mat = jnp.transpose(self.weight, (2, 3, 4, 1, 0)).reshape(K, N)
        w_mat = jnp.pad(w_mat, ((0, 0), (0, N_pad - N))).astype(cdt)
        b_mat = jnp.pad(self.bias.reshape(1, N), ((0, 0), (0, N_pad - N)))  # f32

        out = _conv3d_matmul(patches, w_mat, b_mat)              # (M, N_pad) f32
        out = out[:, :N].reshape(n, Do, Ho, Wo, N)
        return jnp.transpose(out, (0, 4, 1, 2, 3))               # NCDHW, f32


# ------------------------------- reference -------------------------------- #
def _reference(x, weight, bias, stride):
    y = lax.conv_general_dilated(
        x, weight, window_strides=(stride, stride, stride), padding="VALID",
        dimension_numbers=("NCDHW", "OIDHW", "NCDHW"))
    return y + bias.reshape(1, -1, 1, 1, 1)


if __name__ == "__main__":
    key = jax.random.PRNGKey(0)
    k_x, k_p = jax.random.split(key)

    # small shapes: batch=2, in_ch=4, out_ch=8, spatial=16, kernel=2, stride=2
    batch, in_ch, out_ch, spatial = 2, 4, 8, 16
    kernel_size, stride = 2, 2

    x = jax.random.normal(k_x, (batch, in_ch, spatial, spatial, spatial),
                          dtype=jnp.float32)

    mod = DownScale(in_ch, out_ch, stride, kernel_size, key=k_p)

    y = jax.block_until_ready(mod(x))

    # Tight check: same bf16-rounded inputs through XLA's conv (validates the
    # kernel math; only f32 accumulation-order differences remain).
    xq = x.astype(jnp.bfloat16).astype(jnp.float32)
    wq = mod.weight.astype(jnp.bfloat16).astype(jnp.float32)
    y_ref = _reference(xq, wq, mod.bias, stride)
    assert y.shape == y_ref.shape, (y.shape, y_ref.shape)
    assert jnp.allclose(y, y_ref, atol=1e-3, rtol=1e-3), "mismatch vs bf16-input reference"

    # Loose check vs full-f32 reference (difference is bf16 input rounding only).
    y_ref32 = _reference(x, mod.weight, mod.bias, stride)
    assert jnp.allclose(y, y_ref32, atol=1e-1, rtol=1e-1), "mismatch vs f32 reference"

    print("KERNEL_OK")
</pallas_src>

<mosaic_0001>
module attributes {stable_mosaic.version = 11 : i64} {
  func.func @_conv_matmul_kernel(%arg0: i32, %arg1: memref<512x32xbf16, #tpu.memory_space<vmem>>, %arg2: memref<32x128xbf16, #tpu.memory_space<vmem>>, %arg3: memref<1x128xf32, #tpu.memory_space<vmem>>, %arg4: memref<512x128xf32, #tpu.memory_space<vmem>>) attributes {dimension_semantics = [#tpu.dimension_semantics<parallel>], iteration_bounds = array<i64: 2>, scalar_prefetch = 0 : i64, scratch_operands = 0 : i64, tpu.core_type = #tpu.core_type<tc>, window_params = [{transform_indices = @transform_0, window_bounds = array<i64: 512, 32>}, {pipeline_mode = #tpu.pipeline_mode<synchronous>, transform_indices = @transform_1, window_bounds = array<i64: 32, 128>}, {pipeline_mode = #tpu.pipeline_mode<synchronous>, transform_indices = @transform_2, window_bounds = array<i64: 1, 128>}, {transform_indices = @transform_3, window_bounds = array<i64: 512, 128>}]} {
    %c0 = arith.constant 0 : index
    %c0_0 = arith.constant 0 : index
    %0 = vector.load %arg1[%c0, %c0_0] : memref<512x32xbf16, #tpu.memory_space<vmem>>, vector<512x32xbf16>
    %c0_1 = arith.constant 0 : index
    %c0_2 = arith.constant 0 : index
    %1 = vector.load %arg2[%c0_1, %c0_2] : memref<32x128xbf16, #tpu.memory_space<vmem>>, vector<32x128xbf16>
    %cst = arith.constant dense<0.000000e+00> : vector<512x128xf32>
    %2 = tpu.matmul %0, %1, %cst {dimension_numbers = #tpu.dot_dimension_numbers<[1], [0], [0], [1], [0, 0, 1, 1], [], []>} : vector<512x32xbf16>, vector<32x128xbf16>, vector<512x128xf32> -> vector<512x128xf32>
    %c0_3 = arith.constant 0 : index
    %c0_4 = arith.constant 0 : index
    %3 = vector.load %arg3[%c0_3, %c0_4] : memref<1x128xf32, #tpu.memory_space<vmem>>, vector<1x128xf32>
    %4 = vector.broadcast %3 : vector<1x128xf32> to vector<512x128xf32>
    %5 = arith.addf %2, %4 : vector<512x128xf32>
    %c0_5 = arith.constant 0 : index
    %c0_6 = arith.constant 0 : index
    %6 = vector.load %arg4[%c0_5, %c0_6] : memref<512x128xf32, #tpu.memory_space<vmem>>, vector<512x128xf32>
    tpu.vector_store %arg4[%c0_5, %c0_6], %5 {strides = array<i32>} : memref<512x128xf32, #tpu.memory_space<vmem>>, vector<512x128xf32>,
    return
  }
  func.func @transform_0(%arg0: i32) -> (i32, i32) {
    %c0_i32 = arith.constant 0 : i32
    %c0_i32_0 = arith.constant 0 : i32
    return %arg0, %c0_i32 : i32, i32
  }
  func.func @transform_1(%arg0: i32) -> (i32, i32) {
    %c0_i32 = arith.constant 0 : i32
    %c0_i32_0 = arith.constant 0 : i32
    %c0_i32_1 = arith.constant 0 : i32
    return %c0_i32, %c0_i32_0 : i32, i32
  }
  func.func @transform_2(%arg0: i32) -> (i32, i32) {
    %c0_i32 = arith.constant 0 : i32
    %c0_i32_0 = arith.constant 0 : i32
    %c0_i32_1 = arith.constant 0 : i32
    return %c0_i32, %c0_i32_0 : i32, i32
  }
  func.func @transform_3(%arg0: i32) -> (i32, i32) {
    %c0_i32 = arith.constant 0 : i32
    %c0_i32_0 = arith.constant 0 : i32
    return %arg0, %c0_i32 : i32, i32
  }
}

</mosaic_0001>

<llo_original>
// kernel: tpu_custom_call.1
$region0: #{tpu_custom_call.1}
  #allocation0 [shape = 'u32[]', space=smem, size = 0x4, offset = 0x4, fixed_abs, tag = 'smem constant byte address 0x4 - core index']
  #allocation1 [shape = 'u32[144,128]{1,0:T(1,128)}', space=vmem, size = 0x12000, scoped, tag = 'internal scratch']
  %s0 = inlined_call_operand.vmem [shape: bf16[1024,32], index: 0, kind: input, shape index: {}]
  %s1 = inlined_call_operand.vmem [shape: bf16[32,128], index: 1, kind: input, shape index: {}]
  %s2 = inlined_call_operand.vmem [shape: f32[1,128], index: 2, kind: input, shape index: {}]
  %s3 = inlined_call_operand.hbm [shape: f32[1024,128], index: 3, kind: output, shape index: {}]
  %s4 = sld [smem:[#allocation0]]
  $region45: #{tpu_custom_call.1} parent=0
    _
  %s6 = ssub.s32 1, %s4
  %s7 = scalar_select 0, %s6, %s4
  $region1: #{tpu_custom_call.1} parent=0
    #allocation2 [shape = 'u8[524288]{0}', space=vmem, size = 0x80000, scoped, tag = 'output window, operand 0']
    #allocation3 [shape = 's32[2]{0}', space=sflag, size = 0x8, scoped, tag = 'scoped memory for tpu_custom_call.1']
    %8 = vsyncpa [#allocation3], 0
    %s9 = scalar_lea.sflag [#allocation3], 1
    %10 = vsyncpa %s9, 0
    loop: start=0, step=1, limit=4
    $region2: #{tpu_custom_call.1} parent=1 // loop_pre_header
      _
    $region3: #{tpu_custom_call.1} parent=1 // loop_header
      %s12 = sphi 0, %s16
      %p13 = scmp.ge.s32.totalorder %s12, 4
      %s22 = sphi 0, %s24
      %s25 = sphi 0, %s22
      %s26 = sphi 0, %s25
      %s42 = sphi 0, %s26
      %s46 = sphi 0, %s46
      %s48 = sphi 0, %s46
      %s49 = sphi 0, %s48
      %s63 = sphi 0, %s49
      %s67 = sphi 0, %s67
      %s69 = sphi 0, %s67
      %s70 = sphi 0, %s69
      %s84 = sphi 0, %s70
      %s90 = sphi 0, %s92
      %s93 = sphi 0, %s90
      %s94 = sphi 0, %s93
      %s110 = sphi 0, %s94
    $region4: #{tpu_custom_call.1} parent=1 // loop_header_branch
      %15 = sbr.rel (%p13) target = $region8
    $region5: #{tpu_custom_call.1} parent=1 // loop_body
      %s17 = ssub.s32 %s12, 1
      %s18 = ssub.s32 %s12, 2
      %s19 = sadd.s32 %s12, 1
      %s20 = ssub.s32 %s12, %s19
      %p21 = scmp.eq.s32.totalorder %s20, 0
      %s23 = sadd.s32 %s22, 1
      %s24 = scalar_select %p21, %s22, %s23
      %p27 = pneg %p21
      %p28 = scmp.eq.s32.totalorder %s12, 1
      %p29 = por %p27, %p28
      %p30 = scmp.ne.s32.totalorder %s22, %s25
      %p31 = scmp.eq.s32.totalorder %s12, 0
      %p32 = por %p30, %p31
      %p33 = scmp.ne.s32.totalorder %s22, %s25
      %p34 = scmp.eq.s32.totalorder %s17, 1
      %p35 = por %p33, %p34
      %p36 = scmp.ne.s32.totalorder %s25, %s26
      %p37 = scmp.eq.s32.totalorder %s17, 0
      %p38 = por %p36, %p37
      %p39 = scmp.ne.s32.totalorder %s25, %s26
      %p40 = scmp.eq.s32.totalorder %s18, 1
      %p41 = por %p39, %p40
      %p43 = scmp.ne.s32.totalorder %s26, %s42
      %p44 = scmp.eq.s32.totalorder %s18, 0
      %p45 = por %p43, %p44
      %s47 = sadd.s32 %s46, 1
      %p50 = scmp.eq.s32.totalorder %s12, 1
      %p51 = scmp.ne.s32.totalorder %s46, %s48
      %p52 = scmp.eq.s32.totalorder %s12, 0
      %p53 = por %p51, %p52
      %p54 = scmp.ne.s32.totalorder %s46, %s48
      %p55 = scmp.eq.s32.totalorder %s17, 1
      %p56 = por %p54, %p55
      %p57 = scmp.ne.s32.totalorder %s48, %s49
      %p58 = scmp.eq.s32.totalorder %s17, 0
      %p59 = por %p57, %p58
      %p60 = scmp.ne.s32.totalorder %s48, %s49
      %p61 = scmp.eq.s32.totalorder %s18, 1
      %p62 = por %p60, %p61
      %p64 = scmp.ne.s32.totalorder %s49, %s63
      %p65 = scmp.eq.s32.totalorder %s18, 0
      %p66 = por %p64, %p65
      %s68 = sadd.s32 %s67, 1
      %p71 = scmp.eq.s32.totalorder %s12, 1
      %p72 = scmp.ne.s32.totalorder %s67, %s69
      %p73 = scmp.eq.s32.totalorder %s12, 0
      %p74 = por %p72, %p73
      %p75 = scmp.ne.s32.totalorder %s67, %s69
      %p76 = scmp.eq.s32.totalorder %s17, 1
      %p77 = por %p75, %p76
      %p78 = scmp.ne.s32.totalorder %s69, %s70
      %p79 = scmp.eq.s32.totalorder %s17, 0
      %p80 = por %p78, %p79
      %p81 = scmp.ne.s32.totalorder %s69, %s70
      %p82 = scmp.eq.s32.totalorder %s18, 1
      %p83 = por %p81, %p82
      %p85 = scmp.ne.s32.totalorder %s70, %s84
      %p86 = scmp.eq.s32.totalorder %s18, 0
      %p87 = por %p85, %p86
      %s88 = ssub.s32 %s12, %s19
      %p89 = scmp.eq.s32.totalorder %s88, 0
      %s91 = sadd.s32 %s90, 1
      %s92 = scalar_select %p89, %s90, %s91
      %p95 = pneg %p89
      %p96 = scmp.eq.s32.totalorder %s12, 1
      %p97 = por %p95, %p96
      %p98 = scmp.ne.s32.totalorder %s90, %s93
      %p99 = scmp.eq.s32.totalorder %s12, 0
      %p100 = por %p98, %p99
      %p101 = scmp.ne.s32.totalorder %s90, %s93
      %p102 = scmp.eq.s32.totalorder %s17, 1
      %p103 = por %p101, %p102
      %p104 = scmp.ne.s32.totalorder %s93, %s94
      %p105 = scmp.eq.s32.totalorder %s17, 0
      %p106 = por %p104, %p105
      %p107 = scmp.ne.s32.totalorder %s93, %s94
      %p108 = scmp.eq.s32.totalorder %s18, 1
      %p109 = por %p107, %p108
      %p111 = scmp.ne.s32.totalorder %s94, %s110
      %p112 = scmp.eq.s32.totalorder %s18, 0
      %p113 = por %p111, %p112
      %p114 = scmp.le.s32.totalorder 1, %s12
      %p115 = scmp.lt.s32.totalorder %s12, 3
      %p116 = pnand %p114, %p115
      %p117 = pneg %p116
      // Predicated region
      $region9: #{tpu_custom_call.1} parent=5 // pred_check
        _
      $region10: #{tpu_custom_call.1} parent=5 // pred_check_branch
        %119 = sbr.rel (%p116) target = $region12
      $region11: #{tpu_custom_call.1} parent=5 // pred_region
        %s120 = ssub.s32 %s12, 1
        // Predicated region
        $region13: #{tpu_custom_call.1} parent=11 // pred_check
          %p121 = pneg %p59
        $region14: #{tpu_custom_call.1} parent=11 // pred_check_branch
          %123 = sbr.rel (%p121) target = $region16
        $region15: #{tpu_custom_call.1} parent=11 // pred_region
          _
        $region16: #{tpu_custom_call.1} parent=11 // pred_fallthru
          _
        // Predicated region
        $region17: #{tpu_custom_call.1} parent=11 // pred_check
          %p124 = pneg %p80
        $region18: #{tpu_custom_call.1} parent=11 // pred_check_branch
          %126 = sbr.rel (%p124) target = $region20
        $region19: #{tpu_custom_call.1} parent=11 // pred_region
          _
        $region20: #{tpu_custom_call.1} parent=11 // pred_fallthru
          _
      $region12: #{tpu_custom_call.1} parent=5 // pred_fallthru
        _
      %p127 = scmp.lt.s32.totalorder %s12, 2
      // Predicated region
      $region21: #{tpu_custom_call.1} parent=5 // pred_check
        %p128 = pneg %p127
      $region22: #{tpu_custom_call.1} parent=5 // pred_check_branch
        %130 = sbr.rel (%p128) target = $region24
      $region23: #{tpu_custom_call.1} parent=5 // pred_region
        // Predicated region
        $region25: #{tpu_custom_call.1} parent=23 // pred_check
          %p131 = pneg %p32
        $region26: #{tpu_custom_call.1} parent=23 // pred_check_branch
          %133 = sbr.rel (%p131) target = $region28
        $region27: #{tpu_custom_call.1} parent=23 // pred_region
          %s134 = smul.u32 64, %s12
          %p135 = scmp.lt.s32.totalorder %s134, 127
          %s136 = scalar_select %p135, %s134, 127
          %s137 = smul.addr %s136, 4
          %s138 = scalar_lea.vmem %s0, %s137
          %s139 = smul.u32 64, %s12
        $region28: #{tpu_custom_call.1} parent=23 // pred_fallthru
          _
      $region24: #{tpu_custom_call.1} parent=5 // pred_fallthru
        _
      %p140 = scmp.le.s32.totalorder 1, %s12
      %p141 = scmp.lt.s32.totalorder %s12, 3
      %p142 = pnand %p140, %p141
      %p143 = pneg %p142
      // Predicated region
      $region29: #{tpu_custom_call.1} parent=5 // pred_check
        _
      $region30: #{tpu_custom_call.1} parent=5 // pred_check_branch
        %145 = sbr.rel (%p142) target = $region32
      $region31: #{tpu_custom_call.1} parent=5 // pred_region
        %s146 = ssub.s32 %s12, 1
        %s147 = smul.u32 64, %s17
        %p148 = scmp.lt.s32.totalorder %s147, 127
        %s149 = scalar_select %p148, %s147, 127
        %s150 = smul.addr %s149, 4
        %s151 = scalar_lea.vmem %s0, %s150
        %p152 = pneg %p38
        %p153 = pneg %p35
        %p154 = pneg %p59
        %p155 = pneg %p56
        %p156 = pneg %p80
        %p157 = pneg %p77
        %p158 = pneg %p106
        %p159 = pneg %p103
        %s160 = sand.u32 %s93, 1
        %s161 = scalar_lea.sflag [#allocation3], %s160
        %s162 = sand.u32 %s93, 1
        %s163 = smul.addr %s162, 512
        %s164 = scalar_lea.vmem [#allocation2], %s163
        %s165 = smul.u32 64, %s17
        %p166 = scmp.lt.s32.totalorder %s165, 127
        %s167 = scalar_select %p166, %s165, 127
        %s168 = smul.addr %s167, 4
        %s169 = scalar_lea.vmem %s0, %s168
        %s170 = smul.u32 64, %s17
        %s171 = smul.u32 64, %s17
        %v173 = vld [vmem:[%s169] sm:$0xf]
        %v174 = vld [vmem:[%s169 + $0x4] sm:$0xf]
        %v175 = vld [vmem:[%s169 + $0x8] sm:$0xf]
        %v176 = vld [vmem:[%s169 + $0xc] sm:$0xf]
        %v177 = vld [vmem:[%s169 + $0x10] sm:$0xf]
        %v178 = vld [vmem:[%s169 + $0x14] sm:$0xf]
        %v179 = vld [vmem:[%s169 + $0x18] sm:$0xf]
        %v180 = vld [vmem:[%s169 + $0x1c] sm:$0xf]
        %v181 = vld [vmem:[%s169 + $0x20] sm:$0xf]
        %v182 = vld [vmem:[%s169 + $0x24] sm:$0xf]
        %v183 = vld [vmem:[%s169 + $0x28] sm:$0xf]
        %v184 = vld [vmem:[%s169 + $0x2c] sm:$0xf]
        %v185 = vld [vmem:[%s169 + $0x30] sm:$0xf]
        %v186 = vld [vmem:[%s169 + $0x34] sm:$0xf]
        %v187 = vld [vmem:[%s169 + $0x38] sm:$0xf]
        %v188 = vld [vmem:[%s169 + $0x3c] sm:$0xf]
        %v189 = vld [vmem:[%s169 + $0x40] sm:$0xf]
        %v190 = vld [vmem:[%s169 + $0x44] sm:$0xf]
        %v191 = vld [vmem:[%s169 + $0x48] sm:$0xf]
        %v192 = vld [vmem:[%s169 + $0x4c] sm:$0xf]
        %v193 = vld [vmem:[%s169 + $0x50] sm:$0xf]
        %v194 = vld [vmem:[%s169 + $0x54] sm:$0xf]
        %v195 = vld [vmem:[%s169 + $0x58] sm:$0xf]
        %v196 = vld [vmem:[%s169 + $0x5c] sm:$0xf]
        %v197 = vld [vmem:[%s169 + $0x60] sm:$0xf]
        %v198 = vld [vmem:[%s169 + $0x64] sm:$0xf]
        %v199 = vld [vmem:[%s169 + $0x68] sm:$0xf]
        %v200 = vld [vmem:[%s169 + $0x6c] sm:$0xf]
        %v201 = vld [vmem:[%s169 + $0x70] sm:$0xf]
        %v202 = vld [vmem:[%s169 + $0x74] sm:$0xf]
        %v203 = vld [vmem:[%s169 + $0x78] sm:$0xf]
        %v204 = vld [vmem:[%s169 + $0x7c] sm:$0xf]
        %v205 = vld [vmem:[%s169 + $0x80] sm:$0xf]
        %v206 = vld [vmem:[%s169 + $0x84] sm:$0xf]
        %v207 = vld [vmem:[%s169 + $0x88] sm:$0xf]
        %v208 = vld [vmem:[%s169 + $0x8c] sm:$0xf]
        %v209 = vld [vmem:[%s169 + $0x90] sm:$0xf]
        %v210 = vld [vmem:[%s169 + $0x94] sm:$0xf]
        %v211 = vld [vmem:[%s169 + $0x98] sm:$0xf]
        %v212 = vld [vmem:[%s169 + $0x9c] sm:$0xf]
        %v213 = vld [vmem:[%s169 + $0xa0] sm:$0xf]
        %v214 = vld [vmem:[%s169 + $0xa4] sm:$0xf]
        %v215 = vld [vmem:[%s169 + $0xa8] sm:$0xf]
        %v216 = vld [vmem:[%s169 + $0xac] sm:$0xf]
        %v217 = vld [vmem:[%s169 + $0xb0] sm:$0xf]
        %v218 = vld [vmem:[%s169 + $0xb4] sm:$0xf]
        %v219 = vld [vmem:[%s169 + $0xb8] sm:$0xf]
        %v220 = vld [vmem:[%s169 + $0xbc] sm:$0xf]
        %v221 = vld [vmem:[%s169 + $0xc0] sm:$0xf]
        %v222 = vld [vmem:[%s169 + $0xc4] sm:$0xf]
        %v223 = vld [vmem:[%s169 + $0xc8] sm:$0xf]
        %v224 = vld [vmem:[%s169 + $0xcc] sm:$0xf]
        %v225 = vld [vmem:[%s169 + $0xd0] sm:$0xf]
        %v226 = vld [vmem:[%s169 + $0xd4] sm:$0xf]
        %v227 = vld [vmem:[%s169 + $0xd8] sm:$0xf]
        %v228 = vld [vmem:[%s169 + $0xdc] sm:$0xf]
        %v229 = vld [vmem:[%s169 + $0xe0] sm:$0xf]
        %v230 = vld [vmem:[%s169 + $0xe4] sm:$0xf]
        %v231 = vld [vmem:[%s169 + $0xe8] sm:$0xf]
        %v232 = vld [vmem:[%s169 + $0xec] sm:$0xf]
        %v233 = vld [vmem:[%s169 + $0xf0] sm:$0xf]
        %v234 = vld [vmem:[%s169 + $0xf4] sm:$0xf]
        %v235 = vld [vmem:[%s169 + $0xf8] sm:$0xf]
        %v236 = vld [vmem:[%s169 + $0xfc] sm:$0xf]
        %v237 = vld [vmem:[%s1] sm:$0xf]
        %v238 = vld [vmem:[%s1 + $0x4] sm:$0xf]
        %v239 = vld [vmem:[%s1 + $0x8] sm:$0xf]
        %v240 = vld [vmem:[%s1 + $0xc] sm:$0xf]
        %v241 = vld [vmem:[%s2] sm:$0x1]
        %v243 = vlaneseq
        %v244 = vshrl.u32 %v243, 7
        %v245 = vsub.s32 0, %v244
        %v246 = vrot.slane %v241, %v245
        %v312 = vunpack.c.l.b16 %v173
        %v313 = vunpack.c.l.b16 %v174
        %v314 = vunpack.c.l.b16 %v175
        %v315 = vunpack.c.l.b16 %v176
        %v316 = vunpack.c.l.b16 %v177
        %v317 = vunpack.c.l.b16 %v178
        %v318 = vunpack.c.l.b16 %v179
        %v319 = vunpack.c.l.b16 %v180
        %v320 = vunpack.c.l.b16 %v181
        %v321 = vunpack.c.l.b16 %v182
        %v322 = vunpack.c.l.b16 %v183
        %v323 = vunpack.c.l.b16 %v184
        %v324 = vunpack.c.l.b16 %v185
        %v325 = vunpack.c.l.b16 %v186
        %v326 = vunpack.c.l.b16 %v187
        %v327 = vunpack.c.l.b16 %v188
        %v328 = vunpack.c.l.b16 %v189
        %v329 = vunpack.c.l.b16 %v190
        %v330 = vunpack.c.l.b16 %v191
        %v331 = vunpack.c.l.b16 %v192
        %v332 = vunpack.c.l.b16 %v193
        %v333 = vunpack.c.l.b16 %v194
        %v334 = vunpack.c.l.b16 %v195
        %v335 = vunpack.c.l.b16 %v196
        %v336 = vunpack.c.l.b16 %v197
        %v337 = vunpack.c.l.b16 %v198
        %v338 = vunpack.c.l.b16 %v199
        %v339 = vunpack.c.l.b16 %v200
        %v340 = vunpack.c.l.b16 %v201
        %v341 = vunpack.c.l.b16 %v202
        %v342 = vunpack.c.l.b16 %v203
        %v343 = vunpack.c.l.b16 %v204
        %v344 = vunpack.c.l.b16 %v205
        %v345 = vunpack.c.l.b16 %v206
        %v346 = vunpack.c.l.b16 %v207
        %v347 = vunpack.c.l.b16 %v208
        %v348 = vunpack.c.l.b16 %v209
        %v349 = vunpack.c.l.b16 %v210
        %v350 = vunpack.c.l.b16 %v211
        %v351 = vunpack.c.l.b16 %v212
        %v352 = vunpack.c.l.b16 %v213
        %v353 = vunpack.c.l.b16 %v214
        %v354 = vunpack.c.l.b16 %v215
        %v355 = vunpack.c.l.b16 %v216
        %v356 = vunpack.c.l.b16 %v217
        %v357 = vunpack.c.l.b16 %v218
        %v358 = vunpack.c.l.b16 %v219
        %v359 = vunpack.c.l.b16 %v220
        %v360 = vunpack.c.l.b16 %v221
        %v361 = vunpack.c.l.b16 %v222
        %v362 = vunpack.c.l.b16 %v223
        %v363 = vunpack.c.l.b16 %v224
        %v364 = vunpack.c.l.b16 %v225
        %v365 = vunpack.c.l.b16 %v226
        %v366 = vunpack.c.l.b16 %v227
        %v367 = vunpack.c.l.b16 %v228
        %v368 = vunpack.c.l.b16 %v229
        %v369 = vunpack.c.l.b16 %v230
        %v370 = vunpack.c.l.b16 %v231
        %v371 = vunpack.c.l.b16 %v232
        %v372 = vunpack.c.l.b16 %v233
        %v373 = vunpack.c.l.b16 %v234
        %v374 = vunpack.c.l.b16 %v235
        %v375 = vunpack.c.l.b16 %v236
        %v376 = vpack.c.b16 %v313, %v312
        %v377 = vpack.c.b16 %v315, %v314
        %v378 = vpack.c.b16 %v317, %v316
        %v379 = vpack.c.b16 %v319, %v318
        %v380 = vpack.c.b16 %v321, %v320
        %v381 = vpack.c.b16 %v323, %v322
        %v382 = vpack.c.b16 %v325, %v324
        %v383 = vpack.c.b16 %v327, %v326
        %v384 = vpack.c.b16 %v329, %v328
        %v385 = vpack.c.b16 %v331, %v330
        %v386 = vpack.c.b16 %v333, %v332
        %v387 = vpack.c.b16 %v335, %v334
        %v388 = vpack.c.b16 %v337, %v336
        %v389 = vpack.c.b16 %v339, %v338
        %v390 = vpack.c.b16 %v341, %v340
        %v391 = vpack.c.b16 %v343, %v342
        %v392 = vpack.c.b16 %v345, %v344
        %v393 = vpack.c.b16 %v347, %v346
        %v394 = vpack.c.b16 %v349, %v348
        %v395 = vpack.c.b16 %v351, %v350
        %v396 = vpack.c.b16 %v353, %v352
        %v397 = vpack.c.b16 %v355, %v354
        %v398 = vpack.c.b16 %v357, %v356
        %v399 = vpack.c.b16 %v359, %v358
        %v400 = vpack.c.b16 %v361, %v360
        %v401 = vpack.c.b16 %v363, %v362
        %v402 = vpack.c.b16 %v365, %v364
        %v403 = vpack.c.b16 %v367, %v366
        %v404 = vpack.c.b16 %v369, %v368
        %v405 = vpack.c.b16 %v371, %v370
        %v406 = vpack.c.b16 %v373, %v372
        %v407 = vpack.c.b16 %v375, %v374
        %v412 = vunpack.c.l.b16 %v237
        %v413 = vunpack.c.l.b16 %v238
        %v414 = vunpack.c.l.b16 %v239
        %v415 = vunpack.c.l.b16 %v240
        %v416 = vpack.c.b16 %v413, %v412
        %v417 = vpack.c.b16 %v415, %v414
        %vm420 = vcmask 261120
        %v422 = vsel %vm420, %v376, 0
        %v425 = vsel %vm420, %v377, 0
        %v428 = vsel %vm420, %v378, 0
        %v431 = vsel %vm420, %v379, 0
        %v434 = vsel %vm420, %v380, 0
        %v437 = vsel %vm420, %v381, 0
        %v440 = vsel %vm420, %v382, 0
        %v443 = vsel %vm420, %v383, 0
        %v446 = vsel %vm420, %v384, 0
        %v449 = vsel %vm420, %v385, 0
        %v452 = vsel %vm420, %v386, 0
        %v455 = vsel %vm420, %v387, 0
        %v458 = vsel %vm420, %v388, 0
        %v461 = vsel %vm420, %v389, 0
        %v464 = vsel %vm420, %v390, 0
        %v467 = vsel %vm420, %v391, 0
        %v470 = vsel %vm420, %v392, 0
        %v473 = vsel %vm420, %v393, 0
        %v476 = vsel %vm420, %v394, 0
        %v479 = vsel %vm420, %v395, 0
        %v482 = vsel %vm420, %v396, 0
        %v485 = vsel %vm420, %v397, 0
        %v488 = vsel %vm420, %v398, 0
        %v491 = vsel %vm420, %v399, 0
        %v494 = vsel %vm420, %v400, 0
        %v497 = vsel %vm420, %v401, 0
        %v500 = vsel %vm420, %v402, 0
        %v503 = vsel %vm420, %v403, 0
        %v506 = vsel %vm420, %v404, 0
        %v509 = vsel %vm420, %v405, 0
        %v512 = vsel %vm420, %v406, 0
        %v515 = vsel %vm420, %v407, 0
        %517 = vmatprep.subr.bf16.mxu0 0
        %518 = vmatpush1.bf16.msra.mxu0 %v416
        %519 = vmatprep.subr.bf16.mxu0 0
        %520 = vmatpush1.bf16.msra.mxu0 %v417
        %521 = vmatprep.subr.bf16.mxu0 0
        %522 = vmatpush1.bf16.msra.mxu0 0
        %523 = vmatprep.subr.bf16.mxu0 0
        %524 = vmatpush1.bf16.msra.mxu0 0
        %525 = vmatprep.subr.bf16.mxu0 0
        %526 = vmatpush1.bf16.msra.mxu0 0
        %527 = vmatprep.subr.bf16.mxu0 0
        %528 = vmatpush1.bf16.msra.mxu0 0
        %529 = vmatprep.subr.bf16.mxu0 0
        %530 = vmatpush1.bf16.msra.mxu0 0
        %531 = vmatprep.subr.bf16.mxu0 0
        %532 = vmatpush1.bf16.msra.mxu0 0
        %533 = vmatprep.subr.bf16.mxu0 0
        %534 = vmatpush1.bf16.msra.mxu0 0
        %535 = vmatprep.subr.bf16.mxu0 0
        %536 = vmatpush1.bf16.msra.mxu0 0
        %537 = vmatprep.subr.bf16.mxu0 0
        %538 = vmatpush1.bf16.msra.mxu0 0
        %539 = vmatprep.subr.bf16.mxu0 0
        %540 = vmatpush1.bf16.msra.mxu0 0
        %541 = vmatprep.subr.bf16.mxu0 0
        %542 = vmatpush1.bf16.msra.mxu0 0
        %543 = vmatprep.subr.bf16.mxu0 0
        %544 = vmatpush1.bf16.msra.mxu0 0
        %545 = vmatprep.subr.bf16.mxu0 0
        %546 = vmatpush1.bf16.msra.mxu0 0
        %547 = vmatprep.subr.bf16.mxu0 0
        %548 = vmatpush1.bf16.msra.mxu0 0
        %549 = vmatprep.mubr.bf16.mxu0 0
        %550 = vmatmul.mubr.bf16.gmra.mrb[0].mxu0 %v422
        %v551 = vpop.f32.mrb[0].mxu0
        %v552 = vadd.f32 %v246, %v551
        %v553 = vpop.f32.mrb[0].mxu0
        %v554 = vpop.f32.mrb[0].mxu0
        %v555 = vadd.f32 %v246, %v554
        %v556 = vpop.f32.mrb[0].mxu0
        %557 = vmatprep.mubr.bf16.mxu0 0
        %558 = vmatmul.mubr.bf16.gmra.mrb[0].mxu0 %v425
        %v559 = vpop.f32.mrb[0].mxu0
        %v560 = vadd.f32 %v246, %v559
        %v561 = vpop.f32.mrb[0].mxu0
        %v562 = vpop.f32.mrb[0].mxu0
        %v563 = vadd.f32 %v246, %v562
        %v564 = vpop.f32.mrb[0].mxu0
        %565 = vmatprep.mubr.bf16.mxu0 0
        %566 = vmatmul.mubr.bf16.gmra.mrb[0].mxu0 %v428
        %v567 = vpop.f32.mrb[0].mxu0
        %v568 = vadd.f32 %v246, %v567
        %v569 = vpop.f32.mrb[0].mxu0
        %v570 = vpop.f32.mrb[0].mxu0
        %v571 = vadd.f32 %v246, %v570
        %v572 = vpop.f32.mrb[0].mxu0
        %573 = vmatprep.mubr.bf16.mxu0 0
        %574 = vmatmul.mubr.bf16.gmra.mrb[0].mxu0 %v431
        %v575 = vpop.f32.mrb[0].mxu0
        %v576 = vadd.f32 %v246, %v575
        %v577 = vpop.f32.mrb[0].mxu0
        %v578 = vpop.f32.mrb[0].mxu0
        %v579 = vadd.f32 %v246, %v578
        %v580 = vpop.f32.mrb[0].mxu0
        %581 = vmatprep.mubr.bf16.mxu0 0
        %582 = vmatmul.mubr.bf16.gmra.mrb[0].mxu0 %v434
        %v583 = vpop.f32.mrb[0].mxu0
        %v584 = vadd.f32 %v246, %v583
        %v585 = vpop.f32.mrb[0].mxu0
        %v586 = vpop.f32.mrb[0].mxu0
        %v587 = vadd.f32 %v246, %v586
        %v588 = vpop.f32.mrb[0].mxu0
        %589 = vmatprep.mubr.bf16.mxu0 0
        %590 = vmatmul.mubr.bf16.gmra.mrb[0].mxu0 %v437
        %v591 = vpop.f32.mrb[0].mxu0
        %v592 = vadd.f32 %v246, %v591
        %v593 = vpop.f32.mrb[0].mxu0
        %v594 = vpop.f32.mrb[0].mxu0
        %v595 = vadd.f32 %v246, %v594
        %v596 = vpop.f32.mrb[0].mxu0
        %597 = vmatprep.mubr.bf16.mxu0 0
        %598 = vmatmul.mubr.bf16.gmra.mrb[0].mxu0 %v440
        %v599 = vpop.f32.mrb[0].mxu0
        %v600 = vadd.f32 %v246, %v599
        %v601 = vpop.f32.mrb[0].mxu0
        %v602 = vpop.f32.mrb[0].mxu0
        %v603 = vadd.f32 %v246, %v602
        %v604 = vpop.f32.mrb[0].mxu0
        %605 = vmatprep.mubr.bf16.mxu0 0
        %606 = vmatmul.mubr.bf16.gmra.mrb[0].mxu0 %v443
        %v607 = vpop.f32.mrb[0].mxu0
        %v608 = vadd.f32 %v246, %v607
        %v609 = vpop.f32.mrb[0].mxu0
        %v610 = vpop.f32.mrb[0].mxu0
        %v611 = vadd.f32 %v246, %v610
        %v612 = vpop.f32.mrb[0].mxu0
        %613 = vmatprep.mubr.bf16.mxu0 0
        %614 = vmatmul.mubr.bf16.gmra.mrb[0].mxu0 %v446
        %v615 = vpop.f32.mrb[0].mxu0
        %v616 = vadd.f32 %v246, %v615
        %v617 = vpop.f32.mrb[0].mxu0
        %v618 = vpop.f32.mrb[0].mxu0
        %v619 = vadd.f32 %v246, %v618
        %v620 = vpop.f32.mrb[0].mxu0
        %621 = vmatprep.mubr.bf16.mxu0 0
        %622 = vmatmul.mubr.bf16.gmra.mrb[0].mxu0 %v449
        %v623 = vpop.f32.mrb[0].mxu0
        %v624 = vadd.f32 %v246, %v623
        %v625 = vpop.f32.mrb[0].mxu0
        %v626 = vpop.f32.mrb[0].mxu0
        %v627 = vadd.f32 %v246, %v626
        %v628 = vpop.f32.mrb[0].mxu0
        %629 = vmatprep.mubr.bf16.mxu0 0
        %630 = vmatmul.mubr.bf16.gmra.mrb[0].mxu0 %v452
        %v631 = vpop.f32.mrb[0].mxu0
        %v632 = vadd.f32 %v246, %v631
        %v633 = vpop.f32.mrb[0].mxu0
        %v634 = vpop.f32.mrb[0].mxu0
        %v635 = vadd.f32 %v246, %v634
        %v636 = vpop.f32.mrb[0].mxu0
        %637 = vmatprep.mubr.bf16.mxu0 0
        %638 = vmatmul.mubr.bf16.gmra.mrb[0].mxu0 %v455
        %v639 = vpop.f32.mrb[0].mxu0
        %v640 = vadd.f32 %v246, %v639
        %v641 = vpop.f32.mrb[0].mxu0
        %v642 = vpop.f32.mrb[0].mxu0
        %v643 = vadd.f32 %v246, %v642
        %v644 = vpop.f32.mrb[0].mxu0
        %645 = vmatprep.mubr.bf16.mxu0 0
        %646 = vmatmul.mubr.bf16.gmra.mrb[0].mxu0 %v458
        %v647 = vpop.f32.mrb[0].mxu0
        %v648 = vadd.f32 %v246, %v647
        %v649 = vpop.f32.mrb[0].mxu0
        %v650 = vpop.f32.mrb[0].mxu0
        %v651 = vadd.f32 %v246, %v650
        %v652 = vpop.f32.mrb[0].mxu0
        %653 = vmatprep.mubr.bf16.mxu0 0
        %654 = vmatmul.mubr.bf16.gmra.mrb[0].mxu0 %v461
        %v655 = vpop.f32.mrb[0].mxu0
        %v656 = vadd.f32 %v246, %v655
        %v657 = vpop.f32.mrb[0].mxu0
        %v658 = vpop.f32.mrb[0].mxu0
        %v659 = vadd.f32 %v246, %v658
        %v660 = vpop.f32.mrb[0].mxu0
        %661 = vmatprep.mubr.bf16.mxu0 0
        %662 = vmatmul.mubr.bf16.gmra.mrb[0].mxu0 %v464
        %v663 = vpop.f32.mrb[0].mxu0
        %v664 = vadd.f32 %v246, %v663
        %v665 = vpop.f32.mrb[0].mxu0
        %v666 = vpop.f32.mrb[0].mxu0
        %v667 = vadd.f32 %v246, %v666
        %v668 = vpop.f32.mrb[0].mxu0
        %669 = vmatprep.mubr.bf16.mxu0 0
        %670 = vmatmul.mubr.bf16.gmra.mrb[0].mxu0 %v467
        %v671 = vpop.f32.mrb[0].mxu0
        %v672 = vadd.f32 %v246, %v671
        %v673 = vpop.f32.mrb[0].mxu0
        %v674 = vpop.f32.mrb[0].mxu0
        %v675 = vadd.f32 %v246, %v674
        %v676 = vpop.f32.mrb[0].mxu0
        %677 = vmatprep.mubr.bf16.mxu0 0
        %678 = vmatmul.mubr.bf16.gmra.mrb[0].mxu0 %v470
        %v679 = vpop.f32.mrb[0].mxu0
        %v680 = vadd.f32 %v246, %v679
        %v681 = vpop.f32.mrb[0].mxu0
        %v682 = vpop.f32.mrb[0].mxu0
        %v683 = vadd.f32 %v246, %v682
        %v684 = vpop.f32.mrb[0].mxu0
        %685 = vmatprep.mubr.bf16.mxu0 0
        %686 = vmatmul.mubr.bf16.gmra.mrb[0].mxu0 %v473
        %v687 = vpop.f32.mrb[0].mxu0
        %v688 = vadd.f32 %v246, %v687
        %v689 = vpop.f32.mrb[0].mxu0
        %v690 = vpop.f32.mrb[0].mxu0
        %v691 = vadd.f32 %v246, %v690
        %v692 = vpop.f32.mrb[0].mxu0
        %693 = vmatprep.mubr.bf16.mxu0 0
        %694 = vmatmul.mubr.bf16.gmra.mrb[0].mxu0 %v476
        %v695 = vpop.f32.mrb[0].mxu0
        %v696 = vadd.f32 %v246, %v695
        %v697 = vpop.f32.mrb[0].mxu0
        %v698 = vpop.f32.mrb[0].mxu0
        %v699 = vadd.f32 %v246, %v698
        %v700 = vpop.f32.mrb[0].mxu0
        %701 = vmatprep.mubr.bf16.mxu0 0
        %702 = vmatmul.mubr.bf16.gmra.mrb[0].mxu0 %v479
        %v703 = vpop.f32.mrb[0].mxu0
        %v704 = vadd.f32 %v246, %v703
        %v705 = vpop.f32.mrb[0].mxu0
        %v706 = vpop.f32.mrb[0].mxu0
        %v707 = vadd.f32 %v246, %v706
        %v708 = vpop.f32.mrb[0].mxu0
        %709 = vmatprep.mubr.bf16.mxu0 0
        %710 = vmatmul.mubr.bf16.gmra.mrb[0].mxu0 %v482
        %v711 = vpop.f32.mrb[0].mxu0
        %v712 = vadd.f32 %v246, %v711
        %v713 = vpop.f32.mrb[0].mxu0
        %v714 = vpop.f32.mrb[0].mxu0
        %v715 = vadd.f32 %v246, %v714
        %v716 = vpop.f32.mrb[0].mxu0
        %717 = vmatprep.mubr.bf16.mxu0 0
        %718 = vmatmul.mubr.bf16.gmra.mrb[0].mxu0 %v485
        %v719 = vpop.f32.mrb[0].mxu0
        %v720 = vadd.f32 %v246, %v719
        %v721 = vpop.f32.mrb[0].mxu0
        %v722 = vpop.f32.mrb[0].mxu0
        %v723 = vadd.f32 %v246, %v722
        %v724 = vpop.f32.mrb[0].mxu0
        %725 = vmatprep.mubr.bf16.mxu0 0
        %726 = vmatmul.mubr.bf16.gmra.mrb[0].mxu0 %v488
        %v727 = vpop.f32.mrb[0].mxu0
        %v728 = vadd.f32 %v246, %v727
        %v729 = vpop.f32.mrb[0].mxu0
        %v730 = vpop.f32.mrb[0].mxu0
        %v731 = vadd.f32 %v246, %v730
        %v732 = vpop.f32.mrb[0].mxu0
        %733 = vmatprep.mubr.bf16.mxu0 0
        %734 = vmatmul.mubr.bf16.gmra.mrb[0].mxu0 %v491
        %v735 = vpop.f32.mrb[0].mxu0
        %v736 = vadd.f32 %v246, %v735
        %v737 = vpop.f32.mrb[0].mxu0
        %v738 = vpop.f32.mrb[0].mxu0
        %v739 = vadd.f32 %v246, %v738
        %v740 = vpop.f32.mrb[0].mxu0
        %741 = vmatprep.mubr.bf16.mxu0 0
        %742 = vmatmul.mubr.bf16.gmra.mrb[0].mxu0 %v494
        %v743 = vpop.f32.mrb[0].mxu0
        %v744 = vadd.f32 %v246, %v743
        %v745 = vpop.f32.mrb[0].mxu0
        %v746 = vpop.f32.mrb[0].mxu0
        %v747 = vadd.f32 %v246, %v746
        %v748 = vpop.f32.mrb[0].mxu0
        %749 = vmatprep.mubr.bf16.mxu0 0
        %750 = vmatmul.mubr.bf16.gmra.mrb[0].mxu0 %v497
        %v751 = vpop.f32.mrb[0].mxu0
        %v752 = vadd.f32 %v246, %v751
        %v753 = vpop.f32.mrb[0].mxu0
        %v754 = vpop.f32.mrb[0].mxu0
        %v755 = vadd.f32 %v246, %v754
        %v756 = vpop.f32.mrb[0].mxu0
        %757 = vmatprep.mubr.bf16.mxu0 0
        %758 = vmatmul.mubr.bf16.gmra.mrb[0].mxu0 %v500
        %v759 = vpop.f32.mrb[0].mxu0
        %v760 = vadd.f32 %v246, %v759
        %v761 = vpop.f32.mrb[0].mxu0
        %v762 = vpop.f32.mrb[0].mxu0
        %v763 = vadd.f32 %v246, %v762
        %v764 = vpop.f32.mrb[0].mxu0
        %765 = vmatprep.mubr.bf16.mxu0 0
        %766 = vmatmul.mubr.bf16.gmra.mrb[0].mxu0 %v503
        %v767 = vpop.f32.mrb[0].mxu0
        %v768 = vadd.f32 %v246, %v767
        %v769 = vpop.f32.mrb[0].mxu0
        %v770 = vpop.f32.mrb[0].mxu0
        %v771 = vadd.f32 %v246, %v770
        %v772 = vpop.f32.mrb[0].mxu0
        %773 = vmatprep.mubr.bf16.mxu0 0
        %774 = vmatmul.mubr.bf16.gmra.mrb[0].mxu0 %v506
        %v775 = vpop.f32.mrb[0].mxu0
        %v776 = vadd.f32 %v246, %v775
        %v777 = vpop.f32.mrb[0].mxu0
        %v778 = vpop.f32.mrb[0].mxu0
        %v779 = vadd.f32 %v246, %v778
        %v780 = vpop.f32.mrb[0].mxu0
        %781 = vmatprep.mubr.bf16.mxu0 0
        %782 = vmatmul.mubr.bf16.gmra.mrb[0].mxu0 %v509
        %v783 = vpop.f32.mrb[0].mxu0
        %v784 = vadd.f32 %v246, %v783
        %v785 = vpop.f32.mrb[0].mxu0
        %v786 = vpop.f32.mrb[0].mxu0
        %v787 = vadd.f32 %v246, %v786
        %v788 = vpop.f32.mrb[0].mxu0
        %789 = vmatprep.mubr.bf16.mxu0 0
        %790 = vmatmul.mubr.bf16.gmra.mrb[0].mxu0 %v512
        %v791 = vpop.f32.mrb[0].mxu0
        %v792 = vadd.f32 %v246, %v791
        %v793 = vpop.f32.mrb[0].mxu0
        %v794 = vpop.f32.mrb[0].mxu0
        %v795 = vadd.f32 %v246, %v794
        %v796 = vpop.f32.mrb[0].mxu0
        %797 = vmatprep.mubr.bf16.mxu0 0
        %798 = vmatmul.mubr.bf16.gmra.mrb[0].mxu0 %v515
        %v799 = vpop.f32.mrb[0].mxu0
        %v800 = vadd.f32 %v246, %v799
        %v801 = vpop.f32.mrb[0].mxu0
        %v802 = vpop.f32.mrb[0].mxu0
        %v803 = vadd.f32 %v246, %v802
        %v804 = vpop.f32.mrb[0].mxu0
        %805 = vdwg.mxu0
        %806 = vst [vmem:[%s164] sm:$0xff] %v552
        %807 = vst [vmem:[%s164 + $0x8] sm:$0xff] %v555
        %808 = vst [vmem:[%s164 + $0x10] sm:$0xff] %v560
        %809 = vst [vmem:[%s164 + $0x18] sm:$0xff] %v563
        %810 = vst [vmem:[%s164 + $0x20] sm:$0xff] %v568
        %811 = vst [vmem:[%s164 + $0x28] sm:$0xff] %v571
        %812 = vst [vmem:[%s164 + $0x30] sm:$0xff] %v576
        %813 = vst [vmem:[%s164 + $0x38] sm:$0xff] %v579
        %814 = vst [vmem:[%s164 + $0x40] sm:$0xff] %v584
        %815 = vst [vmem:[%s164 + $0x48] sm:$0xff] %v587
        %816 = vst [vmem:[%s164 + $0x50] sm:$0xff] %v592
        %817 = vst [vmem:[%s164 + $0x58] sm:$0xff] %v595
        %818 = vst [vmem:[%s164 + $0x60] sm:$0xff] %v600
        %819 = vst [vmem:[%s164 + $0x68] sm:$0xff] %v603
        %820 = vst [vmem:[%s164 + $0x70] sm:$0xff] %v608
        %821 = vst [vmem:[%s164 + $0x78] sm:$0xff] %v611
        %822 = vst [vmem:[%s164 + $0x80] sm:$0xff] %v616
        %823 = vst [vmem:[%s164 + $0x88] sm:$0xff] %v619
        %824 = vst [vmem:[%s164 + $0x90] sm:$0xff] %v624
        %825 = vst [vmem:[%s164 + $0x98] sm:$0xff] %v627
        %826 = vst [vmem:[%s164 + $0xa0] sm:$0xff] %v632
        %827 = vst [vmem:[%s164 + $0xa8] sm:$0xff] %v635
        %828 = vst [vmem:[%s164 + $0xb0] sm:$0xff] %v640
        %829 = vst [vmem:[%s164 + $0xb8] sm:$0xff] %v643
        %830 = vst [vmem:[%s164 + $0xc0] sm:$0xff] %v648
        %831 = vst [vmem:[%s164 + $0xc8] sm:$0xff] %v651
        %832 = vst [vmem:[%s164 + $0xd0] sm:$0xff] %v656
        %833 = vst [vmem:[%s164 + $0xd8] sm:$0xff] %v659
        %834 = vst [vmem:[%s164 + $0xe0] sm:$0xff] %v664
        %835 = vst [vmem:[%s164 + $0xe8] sm:$0xff] %v667
        %836 = vst [vmem:[%s164 + $0xf0] sm:$0xff] %v672
        %837 = vst [vmem:[%s164 + $0xf8] sm:$0xff] %v675
        %838 = vst [vmem:[%s164 + $0x100] sm:$0xff] %v680
        %839 = vst [vmem:[%s164 + $0x108] sm:$0xff] %v683
        %840 = vst [vmem:[%s164 + $0x110] sm:$0xff] %v688
        %841 = vst [vmem:[%s164 + $0x118] sm:$0xff] %v691
        %842 = vst [vmem:[%s164 + $0x120] sm:$0xff] %v696
        %843 = vst [vmem:[%s164 + $0x128] sm:$0xff] %v699
        %844 = vst [vmem:[%s164 + $0x130] sm:$0xff] %v704
        %845 = vst [vmem:[%s164 + $0x138] sm:$0xff] %v707
        %846 = vst [vmem:[%s164 + $0x140] sm:$0xff] %v712
        %847 = vst [vmem:[%s164 + $0x148] sm:$0xff] %v715
        %848 = vst [vmem:[%s164 + $0x150] sm:$0xff] %v720
        %849 = vst [vmem:[%s164 + $0x158] sm:$0xff] %v723
        %850 = vst [vmem:[%s164 + $0x160] sm:$0xff] %v728
        %851 = vst [vmem:[%s164 + $0x168] sm:$0xff] %v731
        %852 = vst [vmem:[%s164 + $0x170] sm:$0xff] %v736
        %853 = vst [vmem:[%s164 + $0x178] sm:$0xff] %v739
        %854 = vst [vmem:[%s164 + $0x180] sm:$0xff] %v744
        %855 = vst [vmem:[%s164 + $0x188] sm:$0xff] %v747
        %856 = vst [vmem:[%s164 + $0x190] sm:$0xff] %v752
        %857 = vst [vmem:[%s164 + $0x198] sm:$0xff] %v755
        %858 = vst [vmem:[%s164 + $0x1a0] sm:$0xff] %v760
        %859 = vst [vmem:[%s164 + $0x1a8] sm:$0xff] %v763
        %860 = vst [vmem:[%s164 + $0x1b0] sm:$0xff] %v768
        %861 = vst [vmem:[%s164 + $0x1b8] sm:$0xff] %v771
        %862 = vst [vmem:[%s164 + $0x1c0] sm:$0xff] %v776
        %863 = vst [vmem:[%s164 + $0x1c8] sm:$0xff] %v779
        %864 = vst [vmem:[%s164 + $0x1d0] sm:$0xff] %v784
        %865 = vst [vmem:[%s164 + $0x1d8] sm:$0xff] %v787
        %866 = vst [vmem:[%s164 + $0x1e0] sm:$0xff] %v792
        %867 = vst [vmem:[%s164 + $0x1e8] sm:$0xff] %v795
        %868 = vst [vmem:[%s164 + $0x1f0] sm:$0xff] %v800
        %869 = vst [vmem:[%s164 + $0x1f8] sm:$0xff] %v803
        %s870 = sand.u32 %s93, 1
        %s871 = scalar_lea.sflag [#allocation3], %s870
        %s872 = sand.u32 %s93, 1
        %s873 = smul.addr %s872, 512
        %s874 = scalar_lea.vmem [#allocation2], %s873
        // Predicated region
        $region33: #{tpu_custom_call.1} parent=31 // pred_check
          %p875 = pneg %p103
        $region34: #{tpu_custom_call.1} parent=31 // pred_check_branch
          %877 = sbr.rel (%p875) target = $region36
        $region35: #{tpu_custom_call.1} parent=31 // pred_region
          %s878 = smul.u32 64, %s17
          %s880 = ssub.s32 8192, 8192
          %881 = vsyncadd %s871, %s880
          %s882 = smul.addr %s878, 128
          %s883 = scalar_lea.hbm %s3, %s882
          %s884 = sshll.u32 %s874, 4
          %s885 = int_to_ptr.vmem [resolvable:$true] %s884
          %890 = dma.vmem_to_hbm [thread:$0]  %s885, 8192, %s883, %s871, 128, 128, 8
        $region36: #{tpu_custom_call.1} parent=31 // pred_fallthru
          _
      $region32: #{tpu_custom_call.1} parent=5 // pred_fallthru
        _
      %p891 = scmp.le.s32.totalorder 2, %s12
      // Predicated region
      $region37: #{tpu_custom_call.1} parent=5 // pred_check
        %p892 = pneg %p891
      $region38: #{tpu_custom_call.1} parent=5 // pred_check_branch
        %894 = sbr.rel (%p892) target = $region40
      $region39: #{tpu_custom_call.1} parent=5 // pred_region
        %s895 = ssub.s32 %s12, 2
        // Predicated region
        $region41: #{tpu_custom_call.1} parent=39 // pred_check
          %p896 = pneg %p109
        $region42: #{tpu_custom_call.1} parent=39 // pred_check_branch
          %898 = sbr.rel (%p896) target = $region44
        $region43: #{tpu_custom_call.1} parent=39 // pred_region
          %s899 = sand.u32 %s94, 1
          %s900 = scalar_lea.sflag [#allocation3], %s899
          %s901 = sand.u32 %s94, 1
          %s902 = smul.addr %s901, 512
          %s903 = scalar_lea.vmem [#allocation2], %s902
          %904 = dma.done %s900, 8192
        $region44: #{tpu_custom_call.1} parent=39 // pred_fallthru
          _
      $region40: #{tpu_custom_call.1} parent=5 // pred_fallthru
        _
    $region6: #{tpu_custom_call.1} parent=1 // loop_footer
      %s16 = sadd.s32 1, %s12
    $region7: #{tpu_custom_call.1} parent=1 // loop_footer_branch
      %11 = sbr.rel target = $region3
    $region8: #{tpu_custom_call.1} parent=1 // loop_exit
      _
    %905 = vsyncpa [#allocation3], 1
    %s906 = scalar_lea.sflag [#allocation3], 1
    %907 = vsyncpa %s906, 1

</llo_original>
